<compile_context>
chip_gen: v7x
topology: tpu7x:2x2x1
jax: 0.10.0
libtpu: 0.0.40
codegen_flags: <defaults>
</compile_context>

<pallas_src>
import functools

import jax
import jax.numpy as jnp
from jax.experimental import pallas as pl
from jax.experimental.pallas import tpu as pltpu

_NEG = -1e30  # large finite negative: masked windows die in the ReLU, no NaNs


def _textcnn_kernel(Kmax, mxu_dtype,
                    ids_ref, table_ref, wconv_ref, bmask_ref,
                    wfc_ref, bfc_ref, out_ref):
    Bt, L, _ = ids_ref.shape
    Vocab, D = table_ref.shape

    # ---- embedding lookup, fused in-kernel as a one-hot matmul (MXU) ----
    # One-hot is exact in bf16, so casting only the MXU operands is safe.
    ids = ids_ref[...]                                          # (Bt, L, 1) int32
    viota = jax.lax.broadcasted_iota(jnp.int32, (Bt, L, Vocab), 2)
    onehot = (viota == ids).astype(mxu_dtype)                   # (Bt, L, Vocab)
    emb = jax.lax.dot_general(
        onehot, table_ref[...],
        dimension_numbers=(((2,), (0,)), ((), ())),
        preferred_element_type=jnp.float32)                     # (Bt, L, D) f32

    # ---- im2col via XLU sublane rolls (no misaligned slice copies) ----
    # cols[:, t, k*D:(k+1)*D] = emb[:, (t+k) mod L, :].  Wrapped rows are only
    # ever multiplied by zero-padded weight taps or land in windows that the
    # -1e30 bias mask kills before the ReLU, so they never affect the result.
    def tap(k):
        s = (L - k) % L
        return emb if s == 0 else pltpu.roll(emb, shift=s, axis=1)

    cols = jnp.concatenate([tap(k) for k in range(Kmax)], axis=2)  # (Bt,L,Kmax*D)

    # ---- all conv branches in ONE matmul + fused bias / tail-mask / ReLU ----
    scores = jax.lax.dot_general(
        cols.astype(mxu_dtype), wconv_ref[...],
        dimension_numbers=(((2,), (0,)), ((), ())),
        preferred_element_type=jnp.float32)                     # (Bt, L, C)
    relu = jnp.maximum(scores + bmask_ref[...], 0.0)            # bias + mask fused
    pooled = jnp.max(relu, axis=1)                              # (Bt, C) concat'd

    # TODO(synk): dropout is identity at inference time; no RNG mask applied.
    logits = jnp.dot(pooled.astype(mxu_dtype), wfc_ref[...],
                     preferred_element_type=jnp.float32) + bfc_ref[...]
    out_ref[...] = logits.astype(out_ref.dtype)


def _pick_batch_tile(B, L, Vocab, D, Kmax, C, vmem_budget_bytes):
    """Batch tile: multiple of 8 (sublane-aligned output block), Bt*L near a
    multiple of a 256-row MXU pass, capped by the per-step VMEM live set, and
    small enough that the grid has >= 2 steps (v7x megacore) when B >= 16."""
    if B < 16:
        # Single step: blocks equal the full arrays, padding to force two grid
        # steps at sub-vreg batch sizes costs more than the second core saves.
        return B
    # Rough f32 per-sample live bytes in one step (one-hot, emb, cols + cast
    # copy, scores/relu).  Conservative: ignores bf16 halving.
    per_sample = 4 * L * (Vocab + D + 2 * Kmax * D + 2 * C)
    bt = max(8, vmem_budget_bytes // per_sample)
    step = max(8, ((256 // max(L, 1)) // 8) * 8)     # Bt granularity (mult of 8)
    bt = min(bt, 16 * step, max(8, B // 2))          # keep >= 2 grid steps
    bt = (bt // step) * step if bt >= step else (bt // 8) * 8
    return int(max(8, bt))


def textcnn_forward(token_ids, params, Ks, Knum, Cla, *,
                    mxu_dtype=jnp.bfloat16, vmem_budget_bytes=16 << 20):
    B, L = token_ids.shape
    Vocab, D = params["embed"].shape
    Ks = tuple(Ks)
    Kmax = max(Ks)
    C = len(Ks) * Knum
    mxu_dtype = jnp.dtype(jnp.float32 if mxu_dtype is None else mxu_dtype)

    # Conv weights: zero-pad taps to Kmax, flatten to (Kmax*D) rows, concat
    # output channels of all branches -> one (Kmax*D, C) matmul operand.
    w_blocks = []
    for i, K in enumerate(Ks):
        w = params[f"conv{i}_w"].astype(jnp.float32)            # (Knum, K, D)
        w = jnp.pad(w, ((0, 0), (0, Kmax - K), (0, 0)))         # (Knum, Kmax, D)
        w_blocks.append(w.reshape(Knum, Kmax * D))
    w_conv = jnp.concatenate(w_blocks, axis=0).T.astype(mxu_dtype)   # (Kmax*D, C)

    # Grid-invariant bias + tail-window mask, hoisted out of the kernel:
    # valid (t, c) -> conv bias, invalid (receptive field past L) -> -1e30.
    b_conv = jnp.concatenate(
        [params[f"conv{i}_b"].astype(jnp.float32) for i in range(len(Ks))])  # (C,)
    t_idx = jnp.arange(L)[:, None]                                            # (L,1)
    valid = jnp.concatenate(
        [jnp.broadcast_to(t_idx < (L - K + 1), (L, Knum)) for K in Ks], axis=1)
    bias_mask = jnp.where(valid, b_conv[None, :], _NEG).reshape(1, L, C)

    w_fc = params["fc_w"].astype(jnp.float32).T.astype(mxu_dtype)   # (C, Cla)
    b_fc = params["fc_b"].astype(jnp.float32).reshape(1, Cla)
    table = params["embed"].astype(mxu_dtype)                       # (Vocab, D)

    # ---- batch tiling / padding ----
    Bt = _pick_batch_tile(B, L, Vocab, D, Kmax, C, vmem_budget_bytes)
    Bpad = pl.cdiv(B, Bt) * Bt
    ids = token_ids.astype(jnp.int32).reshape(B, L, 1)
    if Bpad != B:
        ids = jnp.pad(ids, ((0, Bpad - B), (0, 0), (0, 0)))      # pad with token 0
    grid = (Bpad // Bt,)

    def full(*shape):
        return pl.BlockSpec(shape, lambda b: (0,) * len(shape))

    in_specs = [
        pl.BlockSpec((Bt, L, 1), lambda b: (b, 0, 0)),           # token ids
        full(Vocab, D),                                          # embed table
        full(Kmax * D, C),                                       # fused conv weights
        full(1, L, C),                                           # bias + tail mask
        full(C, Cla), full(1, Cla),                              # fc weights, bias
    ]
    out_spec = pl.BlockSpec((Bt, Cla), lambda b: (b, 0))

    flops = 2 * Bpad * L * (Vocab * D + Kmax * D * C) + 2 * Bpad * C * Cla
    bytes_accessed = (4 * Bpad * L + 4 * Vocab * D + 4 * Kmax * D * C
                      + 4 * L * C + 4 * C * Cla + 4 * Cla + 4 * Bpad * Cla)

    kernel = functools.partial(_textcnn_kernel, Kmax, mxu_dtype)
    out = pl.pallas_call(
        kernel,
        out_shape=jax.ShapeDtypeStruct((Bpad, Cla), jnp.float32),
        grid=grid,
        in_specs=in_specs,
        out_specs=out_spec,
        compiler_params=pltpu.CompilerParams(
            dimension_semantics=("parallel",),
            vmem_limit_bytes=32 << 20),
        cost_estimate=pl.CostEstimate(
            flops=flops, transcendentals=0, bytes_accessed=bytes_accessed),
    )(ids, table, w_conv, bias_mask, w_fc, b_fc)
    return out[:B]


def textcnn_ref(token_ids, params, Ks, Knum, Cla):
    """Pure-JAX reference mirroring the PyTorch forward (dropout = identity)."""
    emb = jnp.take(params["embed"], token_ids, axis=0).astype(jnp.float32)
    B, L, D = emb.shape
    pooled = []
    for i, K in enumerate(Ks):
        w = params[f"conv{i}_w"]
        b = params[f"conv{i}_b"]
        Lout = L - K + 1
        windows = jnp.stack([emb[:, t:t + K, :] for t in range(Lout)], axis=1)
        conv = jnp.einsum("blkd,ckd->blc", windows, w) + b
        pooled.append(jnp.max(jax.nn.relu(conv), axis=1))
    feats = jnp.concatenate(pooled, axis=1)
    return feats @ params["fc_w"].T + params["fc_b"]


if __name__ == "__main__":
    # Small shapes consistent with the module: Vocab=50, Dim=32, seq=16,
    # kernel_num=8, kernel_size=(3,4,5), class_num=5.
    Vocab, D, L = 50, 32, 16
    Knum, Ks, Cla = 8, (3, 4, 5), 5
    F = len(Ks) * Knum

    keys = jax.random.split(jax.random.PRNGKey(0), 3 + 2 * len(Ks))
    params = {
        "embed": jax.random.normal(keys[0], (Vocab, D), jnp.float32),
        "fc_w": jax.random.normal(keys[1], (Cla, F), jnp.float32) * 0.1,
        "fc_b": jax.random.normal(keys[2], (Cla,), jnp.float32) * 0.1,
    }
    for i, K in enumerate(Ks):
        params[f"conv{i}_w"] = (
            jax.random.normal(keys[3 + 2 * i], (Knum, K, D), jnp.float32) * 0.1)
        params[f"conv{i}_b"] = (
            jax.random.normal(keys[4 + 2 * i], (Knum,), jnp.float32) * 0.1)

    # Case 1: tiny batch, pure-f32 MXU path (tight tolerance, single grid step).
    ids_small = jax.random.randint(jax.random.PRNGKey(1), (4, L), 0, Vocab, jnp.int32)
    out_f32 = textcnn_forward(ids_small, params, Ks, Knum, Cla, mxu_dtype=None)
    jax.block_until_ready(out_f32)
    assert out_f32.shape == (4, Cla), out_f32.shape
    ref_small = textcnn_ref(ids_small, params, Ks, Knum, Cla)
    assert jnp.allclose(out_f32, ref_small, rtol=1e-3, atol=1e-4), (out_f32, ref_small)

    # Case 2: default bf16 MXU operands (f32 accumulation), relaxed tolerance.
    out_bf16 = textcnn_forward(ids_small, params, Ks, Knum, Cla)
    jax.block_until_ready(out_bf16)
    assert jnp.allclose(out_bf16, ref_small, rtol=5e-2, atol=5e-2), (out_bf16, ref_small)

    # Case 3: batch not a multiple of the tile -> padded, multi-step parallel grid.
    ids_big = jax.random.randint(jax.random.PRNGKey(2), (37, L), 0, Vocab, jnp.int32)
    out_big = textcnn_forward(ids_big, params, Ks, Knum, Cla, mxu_dtype=None)
    jax.block_until_ready(out_big)
    assert out_big.shape == (37, Cla), out_big.shape
    ref_big = textcnn_ref(ids_big, params, Ks, Knum, Cla)
    assert jnp.allclose(out_big, ref_big, rtol=1e-3, atol=1e-4), (out_big, ref_big)

    print("KERNEL_OK")
</pallas_src>

<mosaic_0001>
module attributes {stable_mosaic.version = 11 : i64} {
  func.func @_textcnn_kernel(%arg0: i32, %arg1: memref<4x16x1xi32, #tpu.memory_space<vmem>>, %arg2: memref<50x32xf32, #tpu.memory_space<vmem>>, %arg3: memref<160x24xf32, #tpu.memory_space<vmem>>, %arg4: memref<1x16x24xf32, #tpu.memory_space<vmem>>, %arg5: memref<24x5xf32, #tpu.memory_space<vmem>>, %arg6: memref<1x5xf32, #tpu.memory_space<vmem>>, %arg7: memref<4x5xf32, #tpu.memory_space<vmem>>) attributes {dimension_semantics = [#tpu.dimension_semantics<parallel>], iteration_bounds = array<i64: 1>, scalar_prefetch = 0 : i64, scratch_operands = 0 : i64, tpu.core_type = #tpu.core_type<tc>, window_params = [{transform_indices = @transform_0, window_bounds = array<i64: 4, 16, 1>}, {pipeline_mode = #tpu.pipeline_mode<synchronous>, transform_indices = @transform_1, window_bounds = array<i64: 50, 32>}, {pipeline_mode = #tpu.pipeline_mode<synchronous>, transform_indices = @transform_2, window_bounds = array<i64: 160, 24>}, {pipeline_mode = #tpu.pipeline_mode<synchronous>, transform_indices = @transform_3, window_bounds = array<i64: 1, 16, 24>}, {pipeline_mode = #tpu.pipeline_mode<synchronous>, transform_indices = @transform_4, window_bounds = array<i64: 24, 5>}, {pipeline_mode = #tpu.pipeline_mode<synchronous>, transform_indices = @transform_5, window_bounds = array<i64: 1, 5>}, {transform_indices = @transform_6, window_bounds = array<i64: 4, 5>}]} {
    %c0 = arith.constant 0 : index
    %c0_0 = arith.constant 0 : index
    %c0_1 = arith.constant 0 : index
    %0 = vector.load %arg1[%c0, %c0_0, %c0_1] : memref<4x16x1xi32, #tpu.memory_space<vmem>>, vector<4x16x1xi32>
    %1 = tpu.iota {dimensions = array<i32: 2>} : vector<4x16x50xi32>
    %2 = vector.broadcast %0 : vector<4x16x1xi32> to vector<4x16x50xi32>
    %3 = arith.cmpi eq, %1, %2 : vector<4x16x50xi32>
    %4 = arith.extui %3 : vector<4x16x50xi1> to vector<4x16x50xi32>
    %5 = arith.sitofp %4 : vector<4x16x50xi32> to vector<4x16x50xf32>
    %c0_2 = arith.constant 0 : index
    %c0_3 = arith.constant 0 : index
    %6 = vector.load %arg2[%c0_2, %c0_3] : memref<50x32xf32, #tpu.memory_space<vmem>>, vector<50x32xf32>
    %cst = arith.constant dense<0.000000e+00> : vector<4x16x32xf32>
    %7 = tpu.matmul %5, %6, %cst {dimension_numbers = #tpu.dot_dimension_numbers<[2], [0], [0, 1], [1], [0, 0, 0, 1, 1, 1], [], []>} : vector<4x16x50xf32>, vector<50x32xf32>, vector<4x16x32xf32> -> vector<4x16x32xf32>
    %c15_i32 = arith.constant 15 : i32
    %8 = tpu.dynamic_rotate %7 by %c15_i32 dim 1 : vector<4x16x32xf32>, i32 -> vector<4x16x32xf32>
    %c14_i32 = arith.constant 14 : i32
    %9 = tpu.dynamic_rotate %7 by %c14_i32 dim 1 : vector<4x16x32xf32>, i32 -> vector<4x16x32xf32>
    %c13_i32 = arith.constant 13 : i32
    %10 = tpu.dynamic_rotate %7 by %c13_i32 dim 1 : vector<4x16x32xf32>, i32 -> vector<4x16x32xf32>
    %c12_i32 = arith.constant 12 : i32
    %11 = tpu.dynamic_rotate %7 by %c12_i32 dim 1 : vector<4x16x32xf32>, i32 -> vector<4x16x32xf32>
    %12 = tpu.concatenate %7, %8, %9, %10, %11 in 2 : vector<4x16x32xf32>, vector<4x16x32xf32>, vector<4x16x32xf32>, vector<4x16x32xf32>, vector<4x16x32xf32> -> vector<4x16x160xf32>
    %c0_4 = arith.constant 0 : index
    %c0_5 = arith.constant 0 : index
    %13 = vector.load %arg3[%c0_4, %c0_5] : memref<160x24xf32, #tpu.memory_space<vmem>>, vector<160x24xf32>
    %cst_6 = arith.constant dense<0.000000e+00> : vector<4x16x24xf32>
    %14 = tpu.matmul %12, %13, %cst_6 {dimension_numbers = #tpu.dot_dimension_numbers<[2], [0], [0, 1], [1], [0, 0, 0, 1, 1, 1], [], []>} : vector<4x16x160xf32>, vector<160x24xf32>, vector<4x16x24xf32> -> vector<4x16x24xf32>
    %c0_7 = arith.constant 0 : index
    %c0_8 = arith.constant 0 : index
    %c0_9 = arith.constant 0 : index
    %15 = vector.load %arg4[%c0_7, %c0_8, %c0_9] : memref<1x16x24xf32, #tpu.memory_space<vmem>>, vector<1x16x24xf32>
    %16 = vector.broadcast %15 : vector<1x16x24xf32> to vector<4x16x24xf32>
    %17 = arith.addf %14, %16 : vector<4x16x24xf32>
    %cst_10 = arith.constant 0.000000e+00 : f32
    %18 = vector.broadcast %cst_10 : f32 to vector<4x16x24xf32>
    %19 = arith.maximumf %17, %18 : vector<4x16x24xf32>
    %cst_11 = arith.constant dense<0xFF800000> : vector<4x24xf32>
    %20 = vector.multi_reduction <maximumf>, %19, %cst_11 [1] : vector<4x16x24xf32> to vector<4x24xf32>
    %c0_12 = arith.constant 0 : index
    %c0_13 = arith.constant 0 : index
    %21 = vector.load %arg5[%c0_12, %c0_13] : memref<24x5xf32, #tpu.memory_space<vmem>>, vector<24x5xf32>
    %cst_14 = arith.constant dense<0.000000e+00> : vector<4x5xf32>
    %22 = tpu.matmul %20, %21, %cst_14 {dimension_numbers = #tpu.dot_dimension_numbers<[1], [0], [0], [1], [0, 0, 1, 1], [], []>} : vector<4x24xf32>, vector<24x5xf32>, vector<4x5xf32> -> vector<4x5xf32>
    %c0_15 = arith.constant 0 : index
    %c0_16 = arith.constant 0 : index
    %23 = vector.load %arg6[%c0_15, %c0_16] : memref<1x5xf32, #tpu.memory_space<vmem>>, vector<1x5xf32>
    %24 = vector.broadcast %23 : vector<1x5xf32> to vector<4x5xf32>
    %25 = arith.addf %22, %24 : vector<4x5xf32>
    %c0_17 = arith.constant 0 : index
    %c0_18 = arith.constant 0 : index
    %26 = vector.load %arg7[%c0_17, %c0_18] : memref<4x5xf32, #tpu.memory_space<vmem>>, vector<4x5xf32>
    tpu.vector_store %arg7[%c0_17, %c0_18], %25 {strides = array<i32>} : memref<4x5xf32, #tpu.memory_space<vmem>>, vector<4x5xf32>,
    return
  }
  func.func @transform_0(%arg0: i32) -> (i32, i32, i32) {
    %c0_i32 = arith.constant 0 : i32
    %c0_i32_0 = arith.constant 0 : i32
    %c0_i32_1 = arith.constant 0 : i32
    return %arg0, %c0_i32, %c0_i32_0 : i32, i32, i32
  }
  func.func @transform_1(%arg0: i32) -> (i32, i32) {
    %c0_i32 = arith.constant 0 : i32
    %c0_i32_0 = arith.constant 0 : i32
    %c0_i32_1 = arith.constant 0 : i32
    return %c0_i32, %c0_i32_0 : i32, i32
  }
  func.func @transform_2(%arg0: i32) -> (i32, i32) {
    %c0_i32 = arith.constant 0 : i32
    %c0_i32_0 = arith.constant 0 : i32
    %c0_i32_1 = arith.constant 0 : i32
    return %c0_i32, %c0_i32_0 : i32, i32
  }
  func.func @transform_3(%arg0: i32) -> (i32, i32, i32) {
    %c0_i32 = arith.constant 0 : i32
    %c0_i32_0 = arith.constant 0 : i32
    %c0_i32_1 = arith.constant 0 : i32
    %c0_i32_2 = arith.constant 0 : i32
    return %c0_i32, %c0_i32_0, %c0_i32_1 : i32, i32, i32
  }
  func.func @transform_4(%arg0: i32) -> (i32, i32) {
    %c0_i32 = arith.constant 0 : i32
    %c0_i32_0 = arith.constant 0 : i32
    %c0_i32_1 = arith.constant 0 : i32
    return %c0_i32, %c0_i32_0 : i32, i32
  }
  func.func @transform_5(%arg0: i32) -> (i32, i32) {
    %c0_i32 = arith.constant 0 : i32
    %c0_i32_0 = arith.constant 0 : i32
    %c0_i32_1 = arith.constant 0 : i32
    return %c0_i32, %c0_i32_0 : i32, i32
  }
  func.func @transform_6(%arg0: i32) -> (i32, i32) {
    %c0_i32 = arith.constant 0 : i32
    %c0_i32_0 = arith.constant 0 : i32
    return %arg0, %c0_i32 : i32, i32
  }
}

</mosaic_0001>

<llo_original>
// kernel: tpu_custom_call.1
$region0: #{tpu_custom_call.1}
  #allocation0 [shape = 'u32[]', space=smem, size = 0x4, offset = 0x4, fixed_abs, tag = 'smem constant byte address 0x4 - core index']
  #allocation1 [shape = 'u32[144,128]{1,0:T(1,128)}', space=vmem, size = 0x12000, scoped, tag = 'internal scratch']
  %s0 = inlined_call_operand.vmem [shape: s32[4,16,1], index: 0, kind: input, shape index: {}]
  %s1 = inlined_call_operand.vmem [shape: f32[50,32], index: 1, kind: input, shape index: {}]
  %s2 = inlined_call_operand.vmem [shape: f32[160,24], index: 2, kind: input, shape index: {}]
  %s3 = inlined_call_operand.vmem [shape: f32[1,16,24], index: 3, kind: input, shape index: {}]
  %s4 = inlined_call_operand.vmem [shape: f32[24,5], index: 4, kind: input, shape index: {}]
  %s5 = inlined_call_operand.vmem [shape: f32[1,5], index: 5, kind: input, shape index: {}]
  %s6 = inlined_call_operand.hbm [shape: f32[4,5], index: 6, kind: output, shape index: {}]
  %s7 = sld [smem:[#allocation0]]
  $region34: #{tpu_custom_call.1} parent=0
    _
  %s9 = ssub.s32 1, %s7
  %s10 = scalar_select 0, %s9, %s7
  $region1: #{tpu_custom_call.1} parent=0
    #allocation2 [shape = 'u8[2048]{0}', space=vmem, size = 0x800, scoped, tag = 'output window, operand 0, single buffered']
    #allocation3 [shape = 's32[1]{0}', space=sflag, size = 0x4, scoped, tag = 'scoped memory for tpu_custom_call.1']
    %11 = vsyncpa [#allocation3], 0
    // Predicated region
    $region2: #{tpu_custom_call.1} parent=1 // pred_check
      _
    $region3: #{tpu_custom_call.1} parent=1 // pred_check_branch
      %13 = sbr.rel (0) target = $region5
    $region4: #{tpu_custom_call.1} parent=1 // pred_region
      _
    $region5: #{tpu_custom_call.1} parent=1 // pred_fallthru
      _
    // Predicated region
    $region6: #{tpu_custom_call.1} parent=1 // pred_check
      _
    $region7: #{tpu_custom_call.1} parent=1 // pred_check_branch
      %15 = sbr.rel (0) target = $region9
    $region8: #{tpu_custom_call.1} parent=1 // pred_region
      _
    $region9: #{tpu_custom_call.1} parent=1 // pred_fallthru
      _
    // Predicated region
    $region10: #{tpu_custom_call.1} parent=1 // pred_check
      _
    $region11: #{tpu_custom_call.1} parent=1 // pred_check_branch
      %17 = sbr.rel (0) target = $region13
    $region12: #{tpu_custom_call.1} parent=1 // pred_region
      _
    $region13: #{tpu_custom_call.1} parent=1 // pred_fallthru
      _
    // Predicated region
    $region14: #{tpu_custom_call.1} parent=1 // pred_check
      _
    $region15: #{tpu_custom_call.1} parent=1 // pred_check_branch
      %19 = sbr.rel (0) target = $region17
    $region16: #{tpu_custom_call.1} parent=1 // pred_region
      _
    $region17: #{tpu_custom_call.1} parent=1 // pred_fallthru
      _
    // Predicated region
    $region18: #{tpu_custom_call.1} parent=1 // pred_check
      _
    $region19: #{tpu_custom_call.1} parent=1 // pred_check_branch
      %21 = sbr.rel (0) target = $region21
    $region20: #{tpu_custom_call.1} parent=1 // pred_region
      _
    $region21: #{tpu_custom_call.1} parent=1 // pred_fallthru
      _
    // Predicated region
    $region22: #{tpu_custom_call.1} parent=1 // pred_check
      _
    $region23: #{tpu_custom_call.1} parent=1 // pred_check_branch
      %23 = sbr.rel (0) target = $region25
    $region24: #{tpu_custom_call.1} parent=1 // pred_region
      _
    $region25: #{tpu_custom_call.1} parent=1 // pred_fallthru
      _
    %v24 = vld [vmem:[%s0] sm:$0xff]
    %v25 = vld [vmem:[%s0 + $0x8] sm:$0xff]
    %v26 = vld [vmem:[%s0 + $0x10] sm:$0xff]
    %v27 = vld [vmem:[%s0 + $0x18] sm:$0xff]
    %v28 = vld [vmem:[%s0 + $0x20] sm:$0xff]
    %v29 = vld [vmem:[%s0 + $0x28] sm:$0xff]
    %v30 = vld [vmem:[%s0 + $0x30] sm:$0xff]
    %v31 = vld [vmem:[%s0 + $0x38] sm:$0xff]
    %v32 = vlaneseq
    %v33 = vand.u32 %v32, 127
    %34 = vset.pattern.permute.xlu0 0
    %35 = vperm.xlu0 %34, %v24
    %v36 = vpop.permute.xlu0 %35
    %37 = vset.pattern.permute.xlu0 0
    %38 = vperm.xlu0 %37, %v25
    %v39 = vpop.permute.xlu0 %38
    %40 = vset.pattern.permute.xlu0 0
    %41 = vperm.xlu0 %40, %v26
    %v42 = vpop.permute.xlu0 %41
    %43 = vset.pattern.permute.xlu0 0
    %44 = vperm.xlu0 %43, %v27
    %v45 = vpop.permute.xlu0 %44
    %46 = vset.pattern.permute.xlu0 0
    %47 = vperm.xlu0 %46, %v28
    %v48 = vpop.permute.xlu0 %47
    %49 = vset.pattern.permute.xlu0 0
    %50 = vperm.xlu0 %49, %v29
    %v51 = vpop.permute.xlu0 %50
    %52 = vset.pattern.permute.xlu0 0
    %53 = vperm.xlu0 %52, %v30
    %v54 = vpop.permute.xlu0 %53
    %55 = vset.pattern.permute.xlu0 0
    %56 = vperm.xlu0 %55, %v31
    %v57 = vpop.permute.xlu0 %56
    %vm58 = vcmp.eq.s32.totalorder %v33, %v36
    %vm59 = vcmp.eq.s32.totalorder %v33, %v39
    %vm60 = vcmp.eq.s32.totalorder %v33, %v42
    %vm61 = vcmp.eq.s32.totalorder %v33, %v45
    %vm62 = vcmp.eq.s32.totalorder %v33, %v48
    %vm63 = vcmp.eq.s32.totalorder %v33, %v51
    %vm64 = vcmp.eq.s32.totalorder %v33, %v54
    %vm65 = vcmp.eq.s32.totalorder %v33, %v57
    %v66 = vsel %vm58, 1, 0
    %v67 = vsel %vm59, 1, 0
    %v68 = vsel %vm60, 1, 0
    %v69 = vsel %vm61, 1, 0
    %v70 = vsel %vm62, 1, 0
    %v71 = vsel %vm63, 1, 0
    %v72 = vsel %vm64, 1, 0
    %v73 = vsel %vm65, 1, 0
    %v74 = vcvt.s32.f32 %v66
    %v75 = vcvt.s32.f32 %v67
    %v76 = vcvt.s32.f32 %v68
    %v77 = vcvt.s32.f32 %v69
    %v78 = vcvt.s32.f32 %v70
    %v79 = vcvt.s32.f32 %v71
    %v80 = vcvt.s32.f32 %v72
    %v81 = vcvt.s32.f32 %v73
    %v82 = vld [vmem:[%s1] sm:$0xff]
    %v83 = vld [vmem:[%s1 + $0x8] sm:$0xff]
    %v84 = vld [vmem:[%s1 + $0x10] sm:$0xff]
    %v85 = vld [vmem:[%s1 + $0x18] sm:$0xff]
    %v86 = vld [vmem:[%s1 + $0x20] sm:$0xff]
    %v87 = vld [vmem:[%s1 + $0x28] sm:$0xff]
    %v88 = vld [vmem:[%s1 + $0x30] sm:$0x3]
    %vm89 = vcmask 408576
    %v91 = vsel %vm89, %v74, 0
    %v94 = vsel %vm89, %v75, 0
    %v97 = vsel %vm89, %v76, 0
    %v100 = vsel %vm89, %v77, 0
    %v103 = vsel %vm89, %v78, 0
    %v106 = vsel %vm89, %v79, 0
    %v109 = vsel %vm89, %v80, 0
    %v112 = vsel %vm89, %v81, 0
    %vm114 = vcmask 1041408
    %v116 = vsel %vm114, %v88, 0
    %118 = vmatprep.subr.mxu0 0.0
    %119 = vmatpush1.msra.mxu0 %v82
    %120 = vmatprep.subr.mxu0 0.0
    %121 = vmatpush1.msra.mxu0 %v83
    %122 = vmatprep.subr.mxu0 0.0
    %123 = vmatpush1.msra.mxu0 %v84
    %124 = vmatprep.subr.mxu0 0.0
    %125 = vmatpush1.msra.mxu0 %v85
    %126 = vmatprep.subr.mxu0 0.0
    %127 = vmatpush1.msra.mxu0 %v86
    %128 = vmatprep.subr.mxu0 0.0
    %129 = vmatpush1.msra.mxu0 %v87
    %130 = vmatprep.subr.mxu0 0.0
    %131 = vmatpush1.msra.mxu0 %v116
    %132 = vmatprep.subr.mxu0 0.0
    %133 = vmatpush1.msra.mxu0 0.0
    %134 = vmatprep.subr.mxu0 0.0
    %135 = vmatpush1.msra.mxu0 0.0
    %136 = vmatprep.subr.mxu0 0.0
    %137 = vmatpush1.msra.mxu0 0.0
    %138 = vmatprep.subr.mxu0 0.0
    %139 = vmatpush1.msra.mxu0 0.0
    %140 = vmatprep.subr.mxu0 0.0
    %141 = vmatpush1.msra.mxu0 0.0
    %142 = vmatprep.subr.mxu0 0.0
    %143 = vmatpush1.msra.mxu0 0.0
    %144 = vmatprep.subr.mxu0 0.0
    %145 = vmatpush1.msra.mxu0 0.0
    %146 = vmatprep.subr.mxu0 0.0
    %147 = vmatpush1.msra.mxu0 0.0
    %148 = vmatprep.subr.mxu0 0.0
    %149 = vmatpush1.msra.mxu0 0.0
    %150 = vmatprep.subr.mxu0 0.0
    %151 = vmatpush1.msra.mxu0 0.0
    %152 = vmatprep.subr.mxu0 0.0
    %153 = vmatpush1.msra.mxu0 0.0
    %154 = vmatprep.subr.mxu0 0.0
    %155 = vmatpush1.msra.mxu0 0.0
    %156 = vmatprep.subr.mxu0 0.0
    %157 = vmatpush1.msra.mxu0 0.0
    %158 = vmatprep.subr.mxu0 0.0
    %159 = vmatpush1.msra.mxu0 0.0
    %160 = vmatprep.subr.mxu0 0.0
    %161 = vmatpush1.msra.mxu0 0.0
    %162 = vmatprep.subr.mxu0 0.0
    %163 = vmatpush1.msra.mxu0 0.0
    %164 = vmatprep.subr.mxu0 0.0
    %165 = vmatpush1.msra.mxu0 0.0
    %166 = vmatprep.subr.mxu0 0.0
    %167 = vmatpush1.msra.mxu0 0.0
    %168 = vmatprep.subr.mxu0 0.0
    %169 = vmatpush1.msra.mxu0 0.0
    %170 = vmatprep.subr.mxu0 0.0
    %171 = vmatpush1.msra.mxu0 0.0
    %172 = vmatprep.subr.mxu0 0.0
    %173 = vmatpush1.msra.mxu0 0.0
    %174 = vmatprep.subr.mxu0 0.0
    %175 = vmatpush1.msra.mxu0 0.0
    %176 = vmatprep.subr.mxu0 0.0
    %177 = vmatpush1.msra.mxu0 0.0
    %178 = vmatprep.subr.mxu0 0.0
    %179 = vmatpush1.msra.mxu0 0.0
    %180 = vmatprep.subr.mxu0 0.0
    %181 = vmatpush1.msra.mxu0 0.0
    %182 = vmatprep.mubr.f32.mxu0 0.0
    %183 = vmatmul.mubr.f32.gmra.mrb[0].mxu0 %v91
    %v184 = vpop.f32.mrb[0].mxu0
    %v185 = vadd.f32 0.0, %v184
    %v186 = vpop.f32.mrb[0].mxu0
    %187 = vmatprep.mubr.f32.mxu0 0.0
    %188 = vmatmul.mubr.f32.gmra.mrb[0].mxu0 %v94
    %v189 = vpop.f32.mrb[0].mxu0
    %v190 = vadd.f32 0.0, %v189
    %v191 = vpop.f32.mrb[0].mxu0
    %192 = vmatprep.mubr.f32.mxu0 0.0
    %193 = vmatmul.mubr.f32.gmra.mrb[0].mxu0 %v97
    %v194 = vpop.f32.mrb[0].mxu0
    %v195 = vadd.f32 0.0, %v194
    %v196 = vpop.f32.mrb[0].mxu0
    %197 = vmatprep.mubr.f32.mxu0 0.0
    %198 = vmatmul.mubr.f32.gmra.mrb[0].mxu0 %v100
    %v199 = vpop.f32.mrb[0].mxu0
    %v200 = vadd.f32 0.0, %v199
    %v201 = vpop.f32.mrb[0].mxu0
    %202 = vmatprep.mubr.f32.mxu0 0.0
    %203 = vmatmul.mubr.f32.gmra.mrb[0].mxu0 %v103
    %v204 = vpop.f32.mrb[0].mxu0
    %v205 = vadd.f32 0.0, %v204
    %v206 = vpop.f32.mrb[0].mxu0
    %207 = vmatprep.mubr.f32.mxu0 0.0
    %208 = vmatmul.mubr.f32.gmra.mrb[0].mxu0 %v106
    %v209 = vpop.f32.mrb[0].mxu0
    %v210 = vadd.f32 0.0, %v209
    %v211 = vpop.f32.mrb[0].mxu0
    %212 = vmatprep.mubr.f32.mxu0 0.0
    %213 = vmatmul.mubr.f32.gmra.mrb[0].mxu0 %v109
    %v214 = vpop.f32.mrb[0].mxu0
    %v215 = vadd.f32 0.0, %v214
    %v216 = vpop.f32.mrb[0].mxu0
    %217 = vmatprep.mubr.f32.mxu0 0.0
    %218 = vmatmul.mubr.f32.gmra.mrb[0].mxu0 %v112
    %v219 = vpop.f32.mrb[0].mxu0
    %v220 = vadd.f32 0.0, %v219
    %v221 = vpop.f32.mrb[0].mxu0
    %222 = vdwg.mxu0
    %v223 = vrot.slane %v185, 1
    %v224 = vrot.slane %v195, 1
    %v225 = vrot.slane %v205, 1
    %v226 = vrot.slane %v215, 1
    %v227 = vrot.slane %v190, 1
    %v228 = vrot.slane %v200, 1
    %v229 = vrot.slane %v210, 1
    %v230 = vrot.slane %v220, 1
    %v231 = vlaneseq
    %v232 = vshrl.u32 %v231, 7
    %vm233 = vcmp.lt.s32.totalorder %v232, 7
    %v234 = vsel %vm233, %v223, %v227
    %v235 = vsel %vm233, %v224, %v228
    %v236 = vsel %vm233, %v225, %v229
    %v237 = vsel %vm233, %v226, %v230
    %v238 = vsel %vm233, %v227, %v223
    %v239 = vsel %vm233, %v228, %v224
    %v240 = vsel %vm233, %v229, %v225
    %v241 = vsel %vm233, %v230, %v226
    %v242 = vrot.slane %v185, 2
    %v243 = vrot.slane %v195, 2
    %v244 = vrot.slane %v205, 2
    %v245 = vrot.slane %v215, 2
    %v246 = vrot.slane %v190, 2
    %v247 = vrot.slane %v200, 2
    %v248 = vrot.slane %v210, 2
    %v249 = vrot.slane %v220, 2
    %vm250 = vcmp.lt.s32.totalorder %v232, 6
    %v251 = vsel %vm250, %v242, %v246
    %v252 = vsel %vm250, %v243, %v247
    %v253 = vsel %vm250, %v244, %v248
    %v254 = vsel %vm250, %v245, %v249
    %v255 = vsel %vm250, %v246, %v242
    %v256 = vsel %vm250, %v247, %v243
    %v257 = vsel %vm250, %v248, %v244
    %v258 = vsel %vm250, %v249, %v245
    %v259 = vrot.slane %v185, 3
    %v260 = vrot.slane %v195, 3
    %v261 = vrot.slane %v205, 3
    %v262 = vrot.slane %v215, 3
    %v263 = vrot.slane %v190, 3
    %v264 = vrot.slane %v200, 3
    %v265 = vrot.slane %v210, 3
    %v266 = vrot.slane %v220, 3
    %vm267 = vcmp.lt.s32.totalorder %v232, 5
    %v268 = vsel %vm267, %v259, %v263
    %v269 = vsel %vm267, %v260, %v264
    %v270 = vsel %vm267, %v261, %v265
    %v271 = vsel %vm267, %v262, %v266
    %v272 = vsel %vm267, %v263, %v259
    %v273 = vsel %vm267, %v264, %v260
    %v274 = vsel %vm267, %v265, %v261
    %v275 = vsel %vm267, %v266, %v262
    %v276 = vrot.slane %v185, 4
    %v277 = vrot.slane %v195, 4
    %v278 = vrot.slane %v205, 4
    %v279 = vrot.slane %v215, 4
    %v280 = vrot.slane %v190, 4
    %v281 = vrot.slane %v200, 4
    %v282 = vrot.slane %v210, 4
    %v283 = vrot.slane %v220, 4
    %vm284 = vcmp.lt.s32.totalorder %v232, 4
    %v285 = vsel %vm284, %v276, %v280
    %v286 = vsel %vm284, %v277, %v281
    %v287 = vsel %vm284, %v278, %v282
    %v288 = vsel %vm284, %v279, %v283
    %v289 = vsel %vm284, %v280, %v276
    %v290 = vsel %vm284, %v281, %v277
    %v291 = vsel %vm284, %v282, %v278
    %v292 = vsel %vm284, %v283, %v279
    %301 = vrot.lane.b32.xlu0 %v234, 32
    %v302 = vpop.permute.xlu0 %301
    %303 = vrot.lane.b32.xlu0 %v238, 32
    %v304 = vpop.permute.xlu0 %303
    %305 = vrot.lane.b32.xlu0 %v235, 32
    %v306 = vpop.permute.xlu0 %305
    %307 = vrot.lane.b32.xlu0 %v239, 32
    %v308 = vpop.permute.xlu0 %307
    %309 = vrot.lane.b32.xlu0 %v236, 32
    %v310 = vpop.permute.xlu0 %309
    %311 = vrot.lane.b32.xlu0 %v240, 32
    %v312 = vpop.permute.xlu0 %311
    %313 = vrot.lane.b32.xlu0 %v237, 32
    %v314 = vpop.permute.xlu0 %313
    %315 = vrot.lane.b32.xlu0 %v241, 32
    %v316 = vpop.permute.xlu0 %315
    %333 = vrot.lane.b32.xlu0 %v251, 64
    %v334 = vpop.permute.xlu0 %333
    %335 = vrot.lane.b32.xlu0 %v255, 64
    %v336 = vpop.permute.xlu0 %335
    %337 = vrot.lane.b32.xlu0 %v252, 64
    %v338 = vpop.permute.xlu0 %337
    %339 = vrot.lane.b32.xlu0 %v256, 64
    %v340 = vpop.permute.xlu0 %339
    %341 = vrot.lane.b32.xlu0 %v253, 64
    %v342 = vpop.permute.xlu0 %341
    %343 = vrot.lane.b32.xlu0 %v257, 64
    %v344 = vpop.permute.xlu0 %343
    %345 = vrot.lane.b32.xlu0 %v254, 64
    %v346 = vpop.permute.xlu0 %345
    %347 = vrot.lane.b32.xlu0 %v258, 64
    %v348 = vpop.permute.xlu0 %347
    %365 = vrot.lane.b32.xlu0 %v268, 96
    %v366 = vpop.permute.xlu0 %365
    %367 = vrot.lane.b32.xlu0 %v272, 96
    %v368 = vpop.permute.xlu0 %367
    %369 = vrot.lane.b32.xlu0 %v269, 96
    %v370 = vpop.permute.xlu0 %369
    %371 = vrot.lane.b32.xlu0 %v273, 96
    %v372 = vpop.permute.xlu0 %371
    %373 = vrot.lane.b32.xlu0 %v270, 96
    %v374 = vpop.permute.xlu0 %373
    %375 = vrot.lane.b32.xlu0 %v274, 96
    %v376 = vpop.permute.xlu0 %375
    %377 = vrot.lane.b32.xlu0 %v271, 96
    %v378 = vpop.permute.xlu0 %377
    %379 = vrot.lane.b32.xlu0 %v275, 96
    %v380 = vpop.permute.xlu0 %379
    %vm389 = vcmask 261120
    %v390 = vsel %vm389, %v185, %v302
    %v391 = vsel %vm389, %v190, %v304
    %v392 = vsel %vm389, %v195, %v306
    %v393 = vsel %vm389, %v200, %v308
    %v394 = vsel %vm389, %v205, %v310
    %v395 = vsel %vm389, %v210, %v312
    %v396 = vsel %vm389, %v215, %v314
    %v397 = vsel %vm389, %v220, %v316
    %vm398 = vcmask 523264
    %v399 = vsel %vm398, %v390, %v334
    %v400 = vsel %vm398, %v391, %v336
    %v401 = vsel %vm398, %v392, %v338
    %v402 = vsel %vm398, %v393, %v340
    %v403 = vsel %vm398, %v394, %v342
    %v404 = vsel %vm398, %v395, %v344
    %v405 = vsel %vm398, %v396, %v346
    %v406 = vsel %vm398, %v397, %v348
    %vm407 = vcmask 785408
    %v408 = vsel %vm407, %v399, %v366
    %v409 = vsel %vm407, %v400, %v368
    %v410 = vsel %vm407, %v401, %v370
    %v411 = vsel %vm407, %v402, %v372
    %v412 = vsel %vm407, %v403, %v374
    %v413 = vsel %vm407, %v404, %v376
    %v414 = vsel %vm407, %v405, %v378
    %v415 = vsel %vm407, %v406, %v380
    %v416 = vld [vmem:[%s2] sm:$0xff]
    %v417 = vld [vmem:[%s2 + $0x8] sm:$0xff]
    %v418 = vld [vmem:[%s2 + $0x10] sm:$0xff]
    %v419 = vld [vmem:[%s2 + $0x18] sm:$0xff]
    %v420 = vld [vmem:[%s2 + $0x20] sm:$0xff]
    %v421 = vld [vmem:[%s2 + $0x28] sm:$0xff]
    %v422 = vld [vmem:[%s2 + $0x30] sm:$0xff]
    %v423 = vld [vmem:[%s2 + $0x38] sm:$0xff]
    %v424 = vld [vmem:[%s2 + $0x40] sm:$0xff]
    %v425 = vld [vmem:[%s2 + $0x48] sm:$0xff]
    %v426 = vld [vmem:[%s2 + $0x50] sm:$0xff]
    %v427 = vld [vmem:[%s2 + $0x58] sm:$0xff]
    %v428 = vld [vmem:[%s2 + $0x60] sm:$0xff]
    %v429 = vld [vmem:[%s2 + $0x68] sm:$0xff]
    %v430 = vld [vmem:[%s2 + $0x70] sm:$0xff]
    %v431 = vld [vmem:[%s2 + $0x78] sm:$0xff]
    %v432 = vld [vmem:[%s2 + $0x80] sm:$0xff]
    %v433 = vld [vmem:[%s2 + $0x88] sm:$0xff]
    %v434 = vld [vmem:[%s2 + $0x90] sm:$0xff]
    %v435 = vld [vmem:[%s2 + $0x98] sm:$0xff]
    %v436 = vld [vmem:[%s3] sm:$0xff]
    %v437 = vld [vmem:[%s3 + $0x8] sm:$0xff]
    %v439 = vsel %vm389, %v285, 0
    %v442 = vsel %vm389, %v289, 0
    %v445 = vsel %vm389, %v286, 0
    %v448 = vsel %vm389, %v290, 0
    %v451 = vsel %vm389, %v287, 0
    %v454 = vsel %vm389, %v291, 0
    %v457 = vsel %vm389, %v288, 0
    %v460 = vsel %vm389, %v292, 0
    %462 = vmatprep.subr.mxu0 0.0
    %463 = vmatpush1.msra.mxu0 %v416
    %464 = vmatprep.subr.mxu0 0.0
    %465 = vmatpush1.msra.mxu0 %v417
    %466 = vmatprep.subr.mxu0 0.0
    %467 = vmatpush1.msra.mxu0 %v418
    %468 = vmatprep.subr.mxu0 0.0
    %469 = vmatpush1.msra.mxu0 %v419
    %470 = vmatprep.subr.mxu0 0.0
    %471 = vmatpush1.msra.mxu0 %v420
    %472 = vmatprep.subr.mxu0 0.0
    %473 = vmatpush1.msra.mxu0 %v421
    %474 = vmatprep.subr.mxu0 0.0
    %475 = vmatpush1.msra.mxu0 %v422
    %476 = vmatprep.subr.mxu0 0.0
    %477 = vmatpush1.msra.mxu0 %v423
    %478 = vmatprep.subr.mxu0 0.0
    %479 = vmatpush1.msra.mxu0 %v424
    %480 = vmatprep.subr.mxu0 0.0
    %481 = vmatpush1.msra.mxu0 %v425
    %482 = vmatprep.subr.mxu0 0.0
    %483 = vmatpush1.msra.mxu0 %v426
    %484 = vmatprep.subr.mxu0 0.0
    %485 = vmatpush1.msra.mxu0 %v427
    %486 = vmatprep.subr.mxu0 0.0
    %487 = vmatpush1.msra.mxu0 %v428
    %488 = vmatprep.subr.mxu0 0.0
    %489 = vmatpush1.msra.mxu0 %v429
    %490 = vmatprep.subr.mxu0 0.0
    %491 = vmatpush1.msra.mxu0 %v430
    %492 = vmatprep.subr.mxu0 0.0
    %493 = vmatpush1.msra.mxu0 %v431
    %494 = vmatprep.subr.mxu0 0.0
    %495 = vmatpush1.msra.mxu0 %v432
    %496 = vmatprep.subr.mxu0 0.0
    %497 = vmatpush1.msra.mxu0 %v433
    %498 = vmatprep.subr.mxu0 0.0
    %499 = vmatpush1.msra.mxu0 %v434
    %500 = vmatprep.subr.mxu0 0.0
    %501 = vmatpush1.msra.mxu0 %v435
    %502 = vmatprep.subr.mxu0 0.0
    %503 = vmatpush1.msra.mxu0 0.0
    %504 = vmatprep.subr.mxu0 0.0
    %505 = vmatpush1.msra.mxu0 0.0
    %506 = vmatprep.subr.mxu0 0.0
    %507 = vmatpush1.msra.mxu0 0.0
    %508 = vmatprep.subr.mxu0 0.0
    %509 = vmatpush1.msra.mxu0 0.0
    %510 = vmatprep.subr.mxu0 0.0
    %511 = vmatpush1.msra.mxu0 0.0
    %512 = vmatprep.subr.mxu0 0.0
    %513 = vmatpush1.msra.mxu0 0.0
    %514 = vmatprep.subr.mxu0 0.0
    %515 = vmatpush1.msra.mxu0 0.0
    %516 = vmatprep.subr.mxu0 0.0
    %517 = vmatpush1.msra.mxu0 0.0
    %518 = vmatprep.subr.mxu0 0.0
    %519 = vmatpush1.msra.mxu0 0.0
    %520 = vmatprep.subr.mxu0 0.0
    %521 = vmatpush1.msra.mxu0 0.0
    %522 = vmatprep.subr.mxu0 0.0
    %523 = vmatpush1.msra.mxu0 0.0
    %524 = vmatprep.subr.mxu0 0.0
    %525 = vmatpush1.msra.mxu0 0.0
    %526 = vmatprep.mubr.f32.mxu0 %v439
    %527 = vmatmul.mubr.f32.gmra.mrb[0].mxu0 %v408
    %v528 = vpop.f32.mrb[0].mxu0
    %v529 = vadd.f32 %v436, %v528
    %v530 = vpop.f32.mrb[0].mxu0
    %531 = vmatprep.mubr.f32.mxu0 %v442
    %532 = vmatmul.mubr.f32.gmra.mrb[0].mxu0 %v409
    %v533 = vpop.f32.mrb[0].mxu0
    %v534 = vadd.f32 %v437, %v533
    %v535 = vpop.f32.mrb[0].mxu0
    %536 = vmatprep.mubr.f32.mxu0 %v445
    %537 = vmatmul.mubr.f32.gmra.mrb[0].mxu0 %v410
    %v538 = vpop.f32.mrb[0].mxu0
    %v539 = vadd.f32 %v436, %v538
    %v540 = vpop.f32.mrb[0].mxu0
    %541 = vmatprep.mubr.f32.mxu0 %v448
    %542 = vmatmul.mubr.f32.gmra.mrb[0].mxu0 %v411
    %v543 = vpop.f32.mrb[0].mxu0
    %v544 = vadd.f32 %v437, %v543
    %v545 = vpop.f32.mrb[0].mxu0
    %546 = vmatprep.mubr.f32.mxu0 %v451
    %547 = vmatmul.mubr.f32.gmra.mrb[0].mxu0 %v412
    %v548 = vpop.f32.mrb[0].mxu0
    %v549 = vadd.f32 %v436, %v548
    %v550 = vpop.f32.mrb[0].mxu0
    %551 = vmatprep.mubr.f32.mxu0 %v454
    %552 = vmatmul.mubr.f32.gmra.mrb[0].mxu0 %v413
    %v553 = vpop.f32.mrb[0].mxu0
    %v554 = vadd.f32 %v437, %v553
    %v555 = vpop.f32.mrb[0].mxu0
    %556 = vmatprep.mubr.f32.mxu0 %v457
    %557 = vmatmul.mubr.f32.gmra.mrb[0].mxu0 %v414
    %v558 = vpop.f32.mrb[0].mxu0
    %v559 = vadd.f32 %v436, %v558
    %v560 = vpop.f32.mrb[0].mxu0
    %561 = vmatprep.mubr.f32.mxu0 %v460
    %562 = vmatmul.mubr.f32.gmra.mrb[0].mxu0 %v415
    %v563 = vpop.f32.mrb[0].mxu0
    %v564 = vadd.f32 %v437, %v563
    %v565 = vpop.f32.mrb[0].mxu0
    %566 = vdwg.mxu0
    %v567 = vmax.f32 %v529, 0.0
    %v568 = vmax.f32 %v534, 0.0
    %v569 = vmax.f32 %v539, 0.0
    %v570 = vmax.f32 %v544, 0.0
    %v571 = vmax.f32 %v549, 0.0
    %v572 = vmax.f32 %v554, 0.0
    %v573 = vmax.f32 %v559, 0.0
    %v574 = vmax.f32 %v564, 0.0
    %vm575 = vcmask 195584
    %v576 = vsel %vm575, %v567, -inf
    %v577 = vsel %vm575, %v568, -inf
    %v578 = vmax.f32 %v576, %v577
    %v579 = vrot.slane %v578, 4
    %v580 = vmax.f32 %v578, %v579
    %v581 = vrot.slane %v580, 2
    %v582 = vmax.f32 %v580, %v581
    %v583 = vrot.slane %v582, 1
    %v584 = vmax.f32 %v582, %v583
    %v585 = vsel %vm575, %v569, -inf
    %v586 = vsel %vm575, %v570, -inf
    %v587 = vmax.f32 %v585, %v586
    %v588 = vrot.slane %v587, 4
    %v589 = vmax.f32 %v587, %v588
    %v590 = vrot.slane %v589, 2
    %v591 = vmax.f32 %v589, %v590
    %v592 = vrot.slane %v591, 1
    %v593 = vmax.f32 %v591, %v592
    %v594 = vsel %vm575, %v571, -inf
    %v595 = vsel %vm575, %v572, -inf
    %v596 = vmax.f32 %v594, %v595
    %v597 = vrot.slane %v596, 4
    %v598 = vmax.f32 %v596, %v597
    %v599 = vrot.slane %v598, 2
    %v600 = vmax.f32 %v598, %v599
    %v601 = vrot.slane %v600, 1
    %v602 = vmax.f32 %v600, %v601
    %v603 = vsel %vm575, %v573, -inf
    %v604 = vsel %vm575, %v574, -inf
    %v605 = vmax.f32 %v603, %v604
    %v606 = vrot.slane %v605, 4
    %v607 = vmax.f32 %v605, %v606
    %v608 = vrot.slane %v607, 2
    %v609 = vmax.f32 %v607, %v608
    %v610 = vrot.slane %v609, 1
    %v611 = vmax.f32 %v609, %v610
    %v612 = vld [vmem:[%s4] sm:$0xff]
    %v613 = vld [vmem:[%s4 + $0x8] sm:$0xff]
    %v614 = vld [vmem:[%s4 + $0x10] sm:$0xff]
    %v615 = vld [vmem:[%s5] sm:$0x1]
    %v617 = vlaneseq
    %v618 = vshrl.u32 %v617, 7
    %v619 = vsub.s32 0, %v618
    %v620 = vrot.slane %v615, %v619
    %vm626 = vcmask 1041409
    %v627 = vsel %vm626, %v593, %v584
    %vm628 = vcmask 1042434
    %v629 = vsel %vm628, %v602, %v627
    %vm630 = vcmask 1043459
    %v631 = vsel %vm630, %v611, %v629
    %v632 = vsel %vm575, %v631, 0
    %634 = vmatprep.subr.mxu0 0.0
    %635 = vmatpush1.msra.mxu0 %v612
    %636 = vmatprep.subr.mxu0 0.0
    %637 = vmatpush1.msra.mxu0 %v613
    %638 = vmatprep.subr.mxu0 0.0
    %639 = vmatpush1.msra.mxu0 %v614
    %640 = vmatprep.subr.mxu0 0.0
    %641 = vmatpush1.msra.mxu0 0.0
    %642 = vmatprep.subr.mxu0 0.0
    %643 = vmatpush1.msra.mxu0 0.0
    %644 = vmatprep.subr.mxu0 0.0
    %645 = vmatpush1.msra.mxu0 0.0
    %646 = vmatprep.subr.mxu0 0.0
    %647 = vmatpush1.msra.mxu0 0.0
    %648 = vmatprep.subr.mxu0 0.0
    %649 = vmatpush1.msra.mxu0 0.0
    %650 = vmatprep.subr.mxu0 0.0
    %651 = vmatpush1.msra.mxu0 0.0
    %652 = vmatprep.subr.mxu0 0.0
    %653 = vmatpush1.msra.mxu0 0.0
    %654 = vmatprep.subr.mxu0 0.0
    %655 = vmatpush1.msra.mxu0 0.0
    %656 = vmatprep.subr.mxu0 0.0
    %657 = vmatpush1.msra.mxu0 0.0
    %658 = vmatprep.subr.mxu0 0.0
    %659 = vmatpush1.msra.mxu0 0.0
    %660 = vmatprep.subr.mxu0 0.0
    %661 = vmatpush1.msra.mxu0 0.0
    %662 = vmatprep.subr.mxu0 0.0
    %663 = vmatpush1.msra.mxu0 0.0
    %664 = vmatprep.subr.mxu0 0.0
    %665 = vmatpush1.msra.mxu0 0.0
    %666 = vmatprep.subr.mxu0 0.0
    %667 = vmatpush1.msra.mxu0 0.0
    %668 = vmatprep.subr.mxu0 0.0
    %669 = vmatpush1.msra.mxu0 0.0
    %670 = vmatprep.subr.mxu0 0.0
    %671 = vmatpush1.msra.mxu0 0.0
    %672 = vmatprep.subr.mxu0 0.0
    %673 = vmatpush1.msra.mxu0 0.0
    %674 = vmatprep.subr.mxu0 0.0
    %675 = vmatpush1.msra.mxu0 0.0
    %676 = vmatprep.subr.mxu0 0.0
    %677 = vmatpush1.msra.mxu0 0.0
    %678 = vmatprep.subr.mxu0 0.0
    %679 = vmatpush1.msra.mxu0 0.0
    %680 = vmatprep.subr.mxu0 0.0
    %681 = vmatpush1.msra.mxu0 0.0
    %682 = vmatprep.subr.mxu0 0.0
    %683 = vmatpush1.msra.mxu0 0.0
    %684 = vmatprep.subr.mxu0 0.0
    %685 = vmatpush1.msra.mxu0 0.0
    %686 = vmatprep.subr.mxu0 0.0
    %687 = vmatpush1.msra.mxu0 0.0
    %688 = vmatprep.subr.mxu0 0.0
    %689 = vmatpush1.msra.mxu0 0.0
    %690 = vmatprep.subr.mxu0 0.0
    %691 = vmatpush1.msra.mxu0 0.0
    %692 = vmatprep.subr.mxu0 0.0
    %693 = vmatpush1.msra.mxu0 0.0
    %694 = vmatprep.subr.mxu0 0.0
    %695 = vmatpush1.msra.mxu0 0.0
    %696 = vmatprep.subr.mxu0 0.0
    %697 = vmatpush1.msra.mxu0 0.0
    %698 = vmatprep.mubr.f32.mxu0 0.0
    %699 = vmatmul.mubr.f32.gmra.mrb[0].mxu0 %v632
    %v700 = vpop.f32.mrb[0].mxu0
    %v701 = vadd.f32 %v620, %v700
    %v702 = vpop.f32.mrb[0].mxu0
    %703 = vdwg.mxu0
    %vm704 = vcmask 35840
    %705 = vst.msk [vmem:[#allocation2] sm:$0xf] %vm704, %v701
    // Predicated region
    $region26: #{tpu_custom_call.1} parent=1 // pred_check
      _
    $region27: #{tpu_custom_call.1} parent=1 // pred_check_branch
      %707 = sbr.rel (0) target = $region29
    $region28: #{tpu_custom_call.1} parent=1 // pred_region
      %s709 = ssub.s32 64, 64
      %710 = vsyncadd [#allocation3], %s709
      %s712 = sshll.u32 [#allocation2], 4
      %s713 = int_to_ptr.vmem [resolvable:$true] %s712
      %715 = dma.vmem_to_hbm [thread:$0]  %s713, 64, %s6, [#allocation3]
    $region29: #{tpu_custom_call.1} parent=1 // pred_fallthru
      _
    // Predicated region
    $region30: #{tpu_custom_call.1} parent=1 // pred_check
      _
    $region31: #{tpu_custom_call.1} parent=1 // pred_check_branch
      %717 = sbr.rel (0) target = $region33
    $region32: #{tpu_custom_call.1} parent=1 // pred_region
      %718 = dma.done [#allocation3], 64
    $region33: #{tpu_custom_call.1} parent=1 // pred_fallthru
      _
    %719 = vsyncpa [#allocation3], 1

</llo_original>
